<compile_context>
chip_gen: v7x
topology: tpu7x:2x2x1
jax: 0.10.0
libtpu: 0.0.40
codegen_flags: <defaults>
</compile_context>

<pallas_src>
import jax
import jax.numpy as jnp
from jax.experimental import pallas as pl
from jax.experimental.pallas import tpu as pltpu


def _make_divisible(v, divisor, min_value=None):
    if min_value is None:
        min_value = divisor
    new_v = max(min_value, int(v + divisor / 2) // divisor * divisor)
    if new_v < 0.9 * v:
        new_v += divisor
    return new_v


def _se_fused_kernel(x_ref, w1t_ref, b1_ref, w2_ref, b2_ref, o_ref, gate_ref):
    # Block shapes:
    #   x_ref   : (TB, C, HW)  TB batch images, spatial flattened onto lanes
    #   w1t_ref : (C, Chid)    fc1 weight, transposed from PyTorch (Chid, C)
    #   b1_ref  : (1, Chid)
    #   w2_ref  : (C, Chid)    fc2 weight, PyTorch layout (C, Chid)
    #   b2_ref  : (C, 1)
    #   o_ref   : (TB, C, HW)
    #   gate_ref: (TB, C, 1)   f32 VMEM scratch, per-channel gates
    tb = x_ref.shape[0]
    inv_hw = 1.0 / x_ref.shape[-1]

    w1t = w1t_ref[...].astype(jnp.float32)      # (C, Chid)
    b1 = b1_ref[...].astype(jnp.float32)        # (1, Chid)
    w2 = w2_ref[...].astype(jnp.float32)        # (C, Chid)
    b2 = b2_ref[...].astype(jnp.float32)        # (C, 1)

    def _gate_for_row(b, carry):
        # Global average pool over spatial (lane reduction).  The f32 cast is
        # consumed by the reduce, so no f32 copy of the slab stays live.
        pooled = jnp.sum(x_ref[b].astype(jnp.float32), axis=-1,
                         keepdims=True) * inv_hw                    # (C, 1)
        # fc1: hidden[k] = sum_c w1[k, c] * pooled[c]   (sublane reduce)
        h = jnp.sum(w1t * pooled, axis=0, keepdims=True) + b1       # (1, Chid)
        h = jnp.maximum(h, 0.0)                                     # ReLU
        # fc2: gate[c] = sum_k w2[c, k] * hidden[k]     (lane reduce)
        g = jnp.sum(w2 * h, axis=-1, keepdims=True) + b2            # (C, 1)
        # h_sigmoid: relu6(g + 3) / 6
        gate_ref[b] = jnp.clip(g + 3.0, 0.0, 6.0) * (1.0 / 6.0)
        return carry

    # Rows beyond B in a partial last block hold padding; their gates are
    # garbage but their out-of-bounds stores are masked by the writeback DMA,
    # and no cross-row mixing occurs.
    jax.lax.fori_loop(0, tb, _gate_for_row, 0)

    # Heavy part: one vectorized, lane-dense scale of the whole slab in the
    # *native* dtype (gate broadcasts across the HW lane axis).
    o_ref[...] = x_ref[...] * gate_ref[...].astype(o_ref.dtype)


def _pick_batch_tile(B, C, HW, itemsize):
    """Images per grid step: big enough to amortize the ~0.35 us per-step
    pipeline overhead (target ~2 MiB x-block), small enough that the
    double-buffered in+out blocks stay inside every generation's VMEM budget
    (v5e 16 MiB scoped default, v7x 64 MiB physical)."""
    bytes_per_img = max(1, C * HW * itemsize)
    target = 2 * 1024 * 1024
    tb = max(1, min(B, target // bytes_per_img, 64))
    return int(tb)


def se_layer(x: jax.Array,
             fc1_w: jax.Array, fc1_b: jax.Array,
             fc2_w: jax.Array, fc2_b: jax.Array) -> jax.Array:
    """Fused SELayer forward.  x: (B, C, H, W) NCHW.
    fc1_w: (Chid, C), fc1_b: (Chid,), fc2_w: (C, Chid), fc2_b: (C,)."""
    B, C, H, W = x.shape
    HW = H * W
    Chid = fc1_w.shape[0]

    # Production note: have the producer emit (B, C, H*W) directly so this
    # reshape cannot lower to an HBM relayout copy around the custom call.
    x3 = x.reshape(B, C, HW)                 # spatial flattened onto lanes
    w1t = fc1_w.T                            # (C, Chid)
    b1 = fc1_b.reshape(1, Chid)
    w2 = fc2_w                               # (C, Chid)
    b2 = fc2_b.reshape(C, 1)

    TB = _pick_batch_tile(B, C, HW, x.dtype.itemsize)
    grid = (pl.cdiv(B, TB),)

    out3 = pl.pallas_call(
        _se_fused_kernel,
        out_shape=jax.ShapeDtypeStruct((B, C, HW), x.dtype),
        grid_spec=pltpu.PrefetchScalarGridSpec(
            num_scalar_prefetch=0,
            grid=grid,
            in_specs=[
                pl.BlockSpec((TB, C, HW), lambda i: (i, 0, 0)),   # x slab
                pl.BlockSpec((C, Chid), lambda i: (0, 0)),        # fc1 W^T
                pl.BlockSpec((1, Chid), lambda i: (0, 0)),        # fc1 bias
                pl.BlockSpec((C, Chid), lambda i: (0, 0)),        # fc2 W
                pl.BlockSpec((C, 1), lambda i: (0, 0)),           # fc2 bias
            ],
            out_specs=pl.BlockSpec((TB, C, HW), lambda i: (i, 0, 0)),
            scratch_shapes=[pltpu.VMEM((TB, C, 1), jnp.float32)],
        ),
        compiler_params=pltpu.CompilerParams(
            dimension_semantics=("parallel",),
            vmem_limit_bytes=32 * 1024 * 1024,
        ),
    )(x3, w1t, b1, w2, b2)

    return out3.reshape(B, C, H, W)


if __name__ == "__main__":
    key = jax.random.PRNGKey(0)
    B, C, H, W = 2, 4, 16, 16
    reduction = 4
    Chid = _make_divisible(C // reduction, 8)   # -> 8

    k1, k2, k3, k4, k5 = jax.random.split(key, 5)
    x = jax.random.normal(k1, (B, C, H, W), dtype=jnp.float32)
    fc1_w = jax.random.normal(k2, (Chid, C), dtype=jnp.float32) * 0.5
    fc1_b = jax.random.normal(k3, (Chid,), dtype=jnp.float32) * 0.1
    fc2_w = jax.random.normal(k4, (C, Chid), dtype=jnp.float32) * 0.5
    fc2_b = jax.random.normal(k5, (C,), dtype=jnp.float32) * 0.1

    y = se_layer(x, fc1_w, fc1_b, fc2_w, fc2_b)
    y = jax.block_until_ready(y)

    # Plain-JAX reference mirroring the PyTorch SELayer forward.
    pooled = x.mean(axis=(2, 3))                               # (B, C)
    hid = jnp.maximum(pooled @ fc1_w.T + fc1_b, 0.0)           # (B, Chid)
    gate = hid @ fc2_w.T + fc2_b                               # (B, C)
    gate = jnp.clip(gate + 3.0, 0.0, 6.0) / 6.0                # h_sigmoid
    y_ref = x * gate[:, :, None, None]

    assert y.shape == x.shape and y.dtype == x.dtype
    assert jnp.allclose(y, y_ref, atol=1e-5, rtol=1e-5), "mismatch vs reference"
    print("KERNEL_OK")
</pallas_src>

<mosaic_0001>
module attributes {stable_mosaic.version = 11 : i64} {
  func.func @_se_fused_kernel(%arg0: i32, %arg1: memref<2x4x256xf32, #tpu.memory_space<vmem>>, %arg2: memref<4x8xf32, #tpu.memory_space<vmem>>, %arg3: memref<1x8xf32, #tpu.memory_space<vmem>>, %arg4: memref<4x8xf32, #tpu.memory_space<vmem>>, %arg5: memref<4x1xf32, #tpu.memory_space<vmem>>, %arg6: memref<2x4x256xf32, #tpu.memory_space<vmem>>, %arg7: memref<2x4x1xf32, #tpu.memory_space<vmem>>) attributes {dimension_semantics = [#tpu.dimension_semantics<parallel>], iteration_bounds = array<i64: 1>, scalar_prefetch = 0 : i64, scratch_operands = 1 : i64, tpu.core_type = #tpu.core_type<tc>, window_params = [{transform_indices = @transform_0, window_bounds = array<i64: 2, 4, 256>}, {pipeline_mode = #tpu.pipeline_mode<synchronous>, transform_indices = @transform_1, window_bounds = array<i64: 4, 8>}, {pipeline_mode = #tpu.pipeline_mode<synchronous>, transform_indices = @transform_2, window_bounds = array<i64: 1, 8>}, {pipeline_mode = #tpu.pipeline_mode<synchronous>, transform_indices = @transform_3, window_bounds = array<i64: 4, 8>}, {pipeline_mode = #tpu.pipeline_mode<synchronous>, transform_indices = @transform_4, window_bounds = array<i64: 4, 1>}, {transform_indices = @transform_5, window_bounds = array<i64: 2, 4, 256>}]} {
    %c0 = arith.constant 0 : index
    %c0_0 = arith.constant 0 : index
    %0 = vector.load %arg2[%c0, %c0_0] : memref<4x8xf32, #tpu.memory_space<vmem>>, vector<4x8xf32>
    %c0_1 = arith.constant 0 : index
    %c0_2 = arith.constant 0 : index
    %1 = vector.load %arg3[%c0_1, %c0_2] : memref<1x8xf32, #tpu.memory_space<vmem>>, vector<1x8xf32>
    %c0_3 = arith.constant 0 : index
    %c0_4 = arith.constant 0 : index
    %2 = vector.load %arg4[%c0_3, %c0_4] : memref<4x8xf32, #tpu.memory_space<vmem>>, vector<4x8xf32>
    %c0_5 = arith.constant 0 : index
    %c0_6 = arith.constant 0 : index
    %3 = vector.load %arg5[%c0_5, %c0_6] : memref<4x1xf32, #tpu.memory_space<vmem>>, vector<4x1xf32>
    %c0_i32 = arith.constant 0 : i32
    %c2_i32 = arith.constant 2 : i32
    %4 = arith.addi %c0_i32, %c2_i32 : i32
    %c1_i32 = arith.constant 1 : i32
    scf.for %arg8 = %c0_i32 to %4 step %c1_i32  : i32 {
      %10 = arith.index_cast %arg8 : i32 to index
      %c0_17 = arith.constant 0 : index
      %c0_18 = arith.constant 0 : index
      %11 = vector.load %arg1[%10, %c0_17, %c0_18] : memref<2x4x256xf32, #tpu.memory_space<vmem>>, vector<1x4x256xf32>
      %12 = vector.shape_cast %11 : vector<1x4x256xf32> to vector<4x256xf32>
      %cst = arith.constant dense<0.000000e+00> : vector<4xf32>
      %13 = vector.multi_reduction <add>, %12, %cst [1] : vector<4x256xf32> to vector<4xf32>
      %14 = vector.shape_cast %13 : vector<4xf32> to vector<4x1xf32>
      %cst_19 = arith.constant 3.906250e-03 : f32
      %15 = vector.broadcast %cst_19 : f32 to vector<4x1xf32>
      %16 = arith.mulf %14, %15 : vector<4x1xf32>
      %17 = vector.broadcast %16 : vector<4x1xf32> to vector<4x8xf32>
      %18 = arith.mulf %0, %17 : vector<4x8xf32>
      %cst_20 = arith.constant dense<0.000000e+00> : vector<8xf32>
      %19 = vector.multi_reduction <add>, %18, %cst_20 [0] : vector<4x8xf32> to vector<8xf32>
      %20 = vector.shape_cast %19 : vector<8xf32> to vector<1x8xf32>
      %21 = arith.addf %20, %1 : vector<1x8xf32>
      %cst_21 = arith.constant 0.000000e+00 : f32
      %22 = vector.broadcast %cst_21 : f32 to vector<1x8xf32>
      %23 = arith.maximumf %21, %22 : vector<1x8xf32>
      %24 = vector.broadcast %23 : vector<1x8xf32> to vector<4x8xf32>
      %25 = arith.mulf %2, %24 : vector<4x8xf32>
      %cst_22 = arith.constant dense<0.000000e+00> : vector<4xf32>
      %26 = vector.multi_reduction <add>, %25, %cst_22 [1] : vector<4x8xf32> to vector<4xf32>
      %27 = vector.shape_cast %26 : vector<4xf32> to vector<4x1xf32>
      %28 = arith.addf %27, %3 : vector<4x1xf32>
      %cst_23 = arith.constant 3.000000e+00 : f32
      %29 = vector.broadcast %cst_23 : f32 to vector<4x1xf32>
      %30 = arith.addf %28, %29 : vector<4x1xf32>
      %cst_24 = arith.constant 0.000000e+00 : f32
      %cst_25 = arith.constant 6.000000e+00 : f32
      %31 = vector.broadcast %cst_24 : f32 to vector<4x1xf32>
      %32 = arith.maximumf %31, %30 : vector<4x1xf32>
      %33 = vector.broadcast %cst_25 : f32 to vector<4x1xf32>
      %34 = arith.minimumf %33, %32 : vector<4x1xf32>
      %cst_26 = arith.constant 0.166666672 : f32
      %35 = vector.broadcast %cst_26 : f32 to vector<4x1xf32>
      %36 = arith.mulf %34, %35 : vector<4x1xf32>
      %37 = arith.index_cast %arg8 : i32 to index
      %c0_27 = arith.constant 0 : index
      %c0_28 = arith.constant 0 : index
      %38 = vector.load %arg7[%37, %c0_27, %c0_28] : memref<2x4x1xf32, #tpu.memory_space<vmem>>, vector<1x4x1xf32>
      %39 = vector.shape_cast %38 : vector<1x4x1xf32> to vector<4x1xf32>
      %40 = vector.shape_cast %36 : vector<4x1xf32> to vector<1x4x1xf32>
      tpu.vector_store %arg7[%37, %c0_27, %c0_28], %40 {strides = array<i32>} : memref<2x4x1xf32, #tpu.memory_space<vmem>>, vector<1x4x1xf32>,
    }
    %c2_i32_7 = arith.constant 2 : i32
    %c0_8 = arith.constant 0 : index
    %c0_9 = arith.constant 0 : index
    %c0_10 = arith.constant 0 : index
    %5 = vector.load %arg1[%c0_8, %c0_9, %c0_10] : memref<2x4x256xf32, #tpu.memory_space<vmem>>, vector<2x4x256xf32>
    %c0_11 = arith.constant 0 : index
    %c0_12 = arith.constant 0 : index
    %c0_13 = arith.constant 0 : index
    %6 = vector.load %arg7[%c0_11, %c0_12, %c0_13] : memref<2x4x1xf32, #tpu.memory_space<vmem>>, vector<2x4x1xf32>
    %7 = vector.broadcast %6 : vector<2x4x1xf32> to vector<2x4x256xf32>
    %8 = arith.mulf %5, %7 : vector<2x4x256xf32>
    %c0_14 = arith.constant 0 : index
    %c0_15 = arith.constant 0 : index
    %c0_16 = arith.constant 0 : index
    %9 = vector.load %arg6[%c0_14, %c0_15, %c0_16] : memref<2x4x256xf32, #tpu.memory_space<vmem>>, vector<2x4x256xf32>
    tpu.vector_store %arg6[%c0_14, %c0_15, %c0_16], %8 {strides = array<i32>} : memref<2x4x256xf32, #tpu.memory_space<vmem>>, vector<2x4x256xf32>,
    return
  }
  func.func @transform_0(%arg0: i32) -> (i32, i32, i32) {
    %c0_i32 = arith.constant 0 : i32
    %c0_i32_0 = arith.constant 0 : i32
    %c0_i32_1 = arith.constant 0 : i32
    return %arg0, %c0_i32, %c0_i32_0 : i32, i32, i32
  }
  func.func @transform_1(%arg0: i32) -> (i32, i32) {
    %c0_i32 = arith.constant 0 : i32
    %c0_i32_0 = arith.constant 0 : i32
    %c0_i32_1 = arith.constant 0 : i32
    return %c0_i32, %c0_i32_0 : i32, i32
  }
  func.func @transform_2(%arg0: i32) -> (i32, i32) {
    %c0_i32 = arith.constant 0 : i32
    %c0_i32_0 = arith.constant 0 : i32
    %c0_i32_1 = arith.constant 0 : i32
    return %c0_i32, %c0_i32_0 : i32, i32
  }
  func.func @transform_3(%arg0: i32) -> (i32, i32) {
    %c0_i32 = arith.constant 0 : i32
    %c0_i32_0 = arith.constant 0 : i32
    %c0_i32_1 = arith.constant 0 : i32
    return %c0_i32, %c0_i32_0 : i32, i32
  }
  func.func @transform_4(%arg0: i32) -> (i32, i32) {
    %c0_i32 = arith.constant 0 : i32
    %c0_i32_0 = arith.constant 0 : i32
    %c0_i32_1 = arith.constant 0 : i32
    return %c0_i32, %c0_i32_0 : i32, i32
  }
  func.func @transform_5(%arg0: i32) -> (i32, i32, i32) {
    %c0_i32 = arith.constant 0 : i32
    %c0_i32_0 = arith.constant 0 : i32
    %c0_i32_1 = arith.constant 0 : i32
    return %arg0, %c0_i32, %c0_i32_0 : i32, i32, i32
  }
}

</mosaic_0001>

<llo_original>
// kernel: tpu_custom_call.1
$region0: #{tpu_custom_call.1}
  #allocation0 [shape = 'u32[]', space=smem, size = 0x4, offset = 0x4, fixed_abs, tag = 'smem constant byte address 0x4 - core index']
  #allocation1 [shape = 'u32[144,128]{1,0:T(1,128)}', space=vmem, size = 0x12000, scoped, tag = 'internal scratch']
  #allocation2 [shape = 'f32[2,4,1]{2,1,0:T(4,128)}', space=vmem, size = 0x1000, scoped, tag = 'scratch operand']
  %s0 = inlined_call_operand.hbm [shape: f32[2,4,256], index: 0, kind: input, shape index: {}]
  %s1 = inlined_call_operand.vmem [shape: f32[4,8], index: 1, kind: input, shape index: {}]
  %s2 = inlined_call_operand.vmem [shape: f32[1,8], index: 2, kind: input, shape index: {}]
  %s3 = inlined_call_operand.vmem [shape: f32[4,8], index: 3, kind: input, shape index: {}]
  %s4 = inlined_call_operand.vmem [shape: f32[4,1], index: 4, kind: input, shape index: {}]
  %s5 = inlined_call_operand.hbm [shape: f32[2,4,256], index: 5, kind: output, shape index: {}]
  %s6 = sld [smem:[#allocation0]]
  $region41: #{tpu_custom_call.1} parent=0
    _
  %s8 = ssub.s32 1, %s6
  %s9 = scalar_select 0, %s8, %s6
  $region1: #{tpu_custom_call.1} parent=0
    #allocation3 [shape = 'u8[8192]{0}', space=vmem, size = 0x2000, scoped, tag = 'input window, operand 0, single buffered']
    #allocation4 [shape = 's32[1]{0}', space=sflag, size = 0x4, scoped, tag = 'scoped memory for tpu_custom_call.1']
    #allocation5 [shape = 's32[1]{0}', space=sflag, size = 0x4, scoped, tag = 'scoped memory for tpu_custom_call.1']
    #allocation6 [shape = 'u8[8192]{0}', space=vmem, size = 0x2000, scoped, tag = 'output window, operand 0, single buffered']
    %10 = vsyncpa [#allocation4], 0
    %11 = vsyncpa [#allocation5], 0
    // Predicated region
    $region2: #{tpu_custom_call.1} parent=1 // pred_check
      _
    $region3: #{tpu_custom_call.1} parent=1 // pred_check_branch
      %13 = sbr.rel (0) target = $region5
    $region4: #{tpu_custom_call.1} parent=1 // pred_region
      %s15 = ssub.s32 256, 256
      %16 = vsyncadd [#allocation4], %s15
      %s17 = sshll.u32 [#allocation3], 4
      %s18 = int_to_ptr.vmem [resolvable:$true] %s17
      %23 = dma.hbm_to_vmem [thread:$0]  %s0, 256, %s18, [#allocation4], 128, 128, 8
    $region5: #{tpu_custom_call.1} parent=1 // pred_fallthru
      _
    // Predicated region
    $region6: #{tpu_custom_call.1} parent=1 // pred_check
      _
    $region7: #{tpu_custom_call.1} parent=1 // pred_check_branch
      %25 = sbr.rel (0) target = $region9
    $region8: #{tpu_custom_call.1} parent=1 // pred_region
      _
    $region9: #{tpu_custom_call.1} parent=1 // pred_fallthru
      _
    // Predicated region
    $region10: #{tpu_custom_call.1} parent=1 // pred_check
      _
    $region11: #{tpu_custom_call.1} parent=1 // pred_check_branch
      %27 = sbr.rel (0) target = $region13
    $region12: #{tpu_custom_call.1} parent=1 // pred_region
      _
    $region13: #{tpu_custom_call.1} parent=1 // pred_fallthru
      _
    // Predicated region
    $region14: #{tpu_custom_call.1} parent=1 // pred_check
      _
    $region15: #{tpu_custom_call.1} parent=1 // pred_check_branch
      %29 = sbr.rel (0) target = $region17
    $region16: #{tpu_custom_call.1} parent=1 // pred_region
      _
    $region17: #{tpu_custom_call.1} parent=1 // pred_fallthru
      _
    // Predicated region
    $region18: #{tpu_custom_call.1} parent=1 // pred_check
      _
    $region19: #{tpu_custom_call.1} parent=1 // pred_check_branch
      %31 = sbr.rel (0) target = $region21
    $region20: #{tpu_custom_call.1} parent=1 // pred_region
      _
    $region21: #{tpu_custom_call.1} parent=1 // pred_fallthru
      _
    // Predicated region
    $region22: #{tpu_custom_call.1} parent=1 // pred_check
      _
    $region23: #{tpu_custom_call.1} parent=1 // pred_check_branch
      %33 = sbr.rel (0) target = $region25
    $region24: #{tpu_custom_call.1} parent=1 // pred_region
      %34 = dma.done [#allocation4], 256
    $region25: #{tpu_custom_call.1} parent=1 // pred_fallthru
      _
    %v35 = vld [vmem:[%s1] sm:$0xf]
    %v36 = vld [vmem:[%s2] sm:$0x1]
    %v37 = vld [vmem:[%s3] sm:$0xf]
    %v38 = vld [vmem:[%s4] sm:$0xf]
    loop: start=0, step=1, limit=2
    $region26: #{tpu_custom_call.1} parent=1 // loop_pre_header
      _
    $region27: #{tpu_custom_call.1} parent=1 // loop_header
      %s40 = sphi 0, %s44
      %p41 = scmp.ge.s32.totalorder %s40, 2
    $region28: #{tpu_custom_call.1} parent=1 // loop_header_branch
      %43 = sbr.rel (%p41) target = $region32
    $region29: #{tpu_custom_call.1} parent=1 // loop_body
      %s45 = smul.u32 %s40, 2
      %s46 = smul.addr %s45, 4
      %s47 = scalar_lea.vmem [#allocation3], %s46
      %v48 = vld [vmem:[%s47] sm:$0xff]
      %v50 = vcombine.high %v48, %v48
      %vm52 = vcmask 1043456
      %v53 = vsel %vm52, %v48, 0.0
      %v54 = vsel %vm52, %v50, 0.0
      %v55 = vadd.f32 %v53, %v54
      %56 = vadd.xlane.f32.xlu0 %v55
      %v57 = vpop.xlane.xlu0 %56
      %v58 = vmul.f32 %v57, 0.00390625
      %v59 = vmul.f32 %v35, %v58
      %vm60 = vcmask 60416
      %v61 = vsel %vm60, %v59, 0.0
      %v62 = vrot.slane %v61, 4
      %v63 = vadd.f32 %v61, %v62
      %v64 = vrot.slane %v63, 2
      %v65 = vadd.f32 %v63, %v64
      %v66 = vrot.slane %v65, 1
      %v67 = vadd.f32 %v65, %v66
      %v68 = vadd.f32 %v67, %v36
      %v69 = vmax.f32 %v68, 0.0
      %v70 = vlaneseq
      %v71 = vshrl.u32 %v70, 7
      %v72 = vsub.s32 0, %v71
      %v73 = vrot.slane %v69, %v72
      %v74 = vmul.f32 %v37, %v73
      %v75 = vsel %vm60, %v74, 0.0
      %76 = vadd.xlane.f32.xlu0 %v75
      %v77 = vpop.xlane.xlu0 %76
      %v78 = vadd.f32 %v77, %v38
      %v79 = vadd.f32 %v78, 3.0
      %v80 = vmax.f32 %v79, 0.0
      %v81 = vmin.f32 %v80, 6.0
      %v82 = vmul.f32 %v81, 0.16666667
      %s83 = smul.u32 %s40, 4
      %s84 = scalar_lea.vmem [#allocation2], %s83
      %vm85 = vcmask 3072
      %86 = vst.msk [vmem:[%s84] sm:$0xf] %vm85, %v82
    $region30: #{tpu_custom_call.1} parent=1 // loop_footer
      %s44 = sadd.s32 1, %s40
    $region31: #{tpu_custom_call.1} parent=1 // loop_footer_branch
      %39 = sbr.rel target = $region27
    $region32: #{tpu_custom_call.1} parent=1 // loop_exit
      _
    %v87 = vld [vmem:[#allocation3] sm:$0xff]
    %v88 = vld [vmem:[#allocation3 + $0x8] sm:$0xff]
    %v89 = vld [vmem:[#allocation2] sm:$0xf]
    %v90 = vld [vmem:[#allocation2 + $0x4] sm:$0xf]
    %92 = vset.pattern.permute.xlu0 0
    %93 = vperm.xlu0 %92, %v89
    %v94 = vpop.permute.xlu0 %93
    %96 = vset.pattern.permute.xlu0 0
    %97 = vperm.xlu0 %96, %v90
    %v98 = vpop.permute.xlu0 %97
    %v100 = vunpack.c.l.s4 839922192
    %v101 = vunpack.c.0.s8 %v100
    %v102 = vlaneseq
    %v103 = vshrl.u32 %v102, 7
    %v104 = vsub.s32 %v101, %v103
    %v105 = vrot.slane %v94, %v104
    %v107 = vunpack.c.l.s4 839922192
    %v108 = vunpack.c.0.s8 %v107
    %v109 = vlaneseq
    %v110 = vshrl.u32 %v109, 7
    %v111 = vsub.s32 %v108, %v110
    %v112 = vrot.slane %v98, %v111
    %v115 = vmul.f32 %v87, %v105
    %v116 = vmul.f32 %v88, %v112
    %117 = vst [vmem:[#allocation6] sm:$0xff] %v115
    %118 = vst [vmem:[#allocation6 + $0x8] sm:$0xff] %v116
    // Predicated region
    $region33: #{tpu_custom_call.1} parent=1 // pred_check
      _
    $region34: #{tpu_custom_call.1} parent=1 // pred_check_branch
      %120 = sbr.rel (0) target = $region36
    $region35: #{tpu_custom_call.1} parent=1 // pred_region
      %s122 = ssub.s32 256, 256
      %123 = vsyncadd [#allocation5], %s122
      %s124 = sshll.u32 [#allocation6], 4
      %s125 = int_to_ptr.vmem [resolvable:$true] %s124
      %130 = dma.vmem_to_hbm [thread:$0]  %s125, 256, %s5, [#allocation5], 128, 128, 8
    $region36: #{tpu_custom_call.1} parent=1 // pred_fallthru
      _
    // Predicated region
    $region37: #{tpu_custom_call.1} parent=1 // pred_check
      _
    $region38: #{tpu_custom_call.1} parent=1 // pred_check_branch
      %132 = sbr.rel (0) target = $region40
    $region39: #{tpu_custom_call.1} parent=1 // pred_region
      %133 = dma.done [#allocation5], 256
    $region40: #{tpu_custom_call.1} parent=1 // pred_fallthru
      _
    %134 = vsyncpa [#allocation4], 1
    %135 = vsyncpa [#allocation5], 1

</llo_original>
